<compile_context>
chip_gen: v7x
topology: tpu7x:2x2x1
jax: 0.10.0
libtpu: 0.0.40
codegen_flags: <defaults>
</compile_context>

<pallas_src>
import jax
import jax.numpy as jnp
from jax.experimental import pallas as pl
from jax.experimental.pallas import tpu as pltpu

BN_EPS = 1e-5

H1, H2 = 120, 80          # logical hidden widths (match the PyTorch module)
H1P, H2P = 128, 128       # lane-padded widths

# rows of the packed (8, 128) f32 parameter slab
ROW_B1, ROW_B2, ROW_GAMMA, ROW_BETA, ROW_B3, ROW_W3 = 0, 1, 2, 3, 4, 5


def _trunk(x_ref, wpack_ref, vec):
    """fc1 -> relu -> fc2 -> batchnorm(train) -> sigmoid.  Returns (B, 128) f32."""
    x = x_ref[...]                               # (B, in_p) bf16
    in_p = x_ref.shape[1]                        # static, 16-aligned split point
    b1 = vec[ROW_B1:ROW_B1 + 1, :]               # (1, 128)
    b2 = vec[ROW_B2:ROW_B2 + 1, :]
    gamma = vec[ROW_GAMMA:ROW_GAMMA + 1, :]
    beta = vec[ROW_BETA:ROW_BETA + 1, :]

    w1 = wpack_ref[0:in_p, :]                    # (in_p, 128) bf16  (zero-cost view)
    w2 = wpack_ref[in_p:in_p + H1P, :]           # (128, 128) bf16

    # fc1: bf16 MXU inputs, f32 accumulation; bias + ReLU in f32
    h1 = jnp.dot(x, w1, preferred_element_type=jnp.float32) + b1
    h1 = jnp.maximum(h1, 0.0)                                      # (B, 128) f32

    # fc2: cast activation to bf16 for the MXU, keep f32 accumulation
    z = jnp.dot(h1.astype(jnp.bfloat16), w2,
                preferred_element_type=jnp.float32) + b2           # (B, 128) f32

    # BatchNorm1d (training mode, biased batch variance) — single-pass stats
    inv_b = 1.0 / z.shape[0]
    s1 = jnp.sum(z, axis=0, keepdims=True)                         # (1, 128)
    s2 = jnp.sum(z * z, axis=0, keepdims=True)                     # (1, 128)
    mean = s1 * inv_b
    var = jnp.maximum(s2 * inv_b - mean * mean, 0.0)               # clamp cancellation
    zn = (z - mean) * jax.lax.rsqrt(var + BN_EPS) * gamma + beta   # padded lanes -> 0

    return jax.nn.sigmoid(zn)                                      # (B, 128) f32


def mlp_kernel_vec_out(x_ref, wpack_ref, vec_ref, o_ref):
    """out_dim == 1: fc3 as VPU multiply + XLU lane reduction (w3 row lives in vec)."""
    vec = vec_ref[...]                                             # (8, 128) f32
    s = _trunk(x_ref, wpack_ref, vec)
    w3_row = vec[ROW_W3:ROW_W3 + 1, :]                             # padded lanes are 0
    b3 = vec[ROW_B3:ROW_B3 + 1, 0:1]                               # (1, 1)
    out = jnp.sum(s * w3_row, axis=-1, keepdims=True) + b3
    o_ref[...] = out.astype(o_ref.dtype)                           # tiny masked store, negligible


def mlp_kernel_mxu_out(x_ref, wpack_ref, w3_ref, vec_ref, o_ref):
    """out_dim > 1: fc3 on the MXU."""
    vec = vec_ref[...]
    s = _trunk(x_ref, wpack_ref, vec)
    out_dim = o_ref.shape[1]
    b3 = vec[ROW_B3:ROW_B3 + 1, :out_dim]
    out = jnp.dot(s.astype(jnp.bfloat16), w3_ref[...],
                  preferred_element_type=jnp.float32) + b3
    o_ref[...] = out.astype(o_ref.dtype)


def init_params(key, in_dim, out_dim=1):
    """nn.Linear-style init (uniform +/- 1/sqrt(fan_in)), weights stored as
    (in_features, out_features), biases as (1, F). BatchNorm1d(80) defaults.
    (bn1 exists in the PyTorch __init__ but is unused in forward -> omitted.)"""
    def linear(k, fan_in, fan_out):
        kw, kb = jax.random.split(k)
        bound = 1.0 / jnp.sqrt(fan_in)
        w = jax.random.uniform(kw, (fan_in, fan_out), jnp.float32, -bound, bound)
        b = jax.random.uniform(kb, (1, fan_out), jnp.float32, -bound, bound)
        return w, b

    k1, k2, k3 = jax.random.split(key, 3)
    w1, b1 = linear(k1, in_dim, H1)
    w2, b2 = linear(k2, H1, H2)
    w3, b3 = linear(k3, H2, out_dim)
    gamma = jnp.ones((1, H2), jnp.float32)
    beta = jnp.zeros((1, H2), jnp.float32)
    return (w1, b1, w2, b2, gamma, beta, w3, b3)


def pack_params(params):
    """One-time repack: pad hidden dims to 128 lanes, stack w1/w2 into one bf16
    slab, and pack all tiny per-feature vectors (and w3 when out_dim==1) into a
    single (8,128) f32 slab -> 3 input DMAs per call."""
    (w1, b1, w2, b2, gamma, beta, w3, b3) = params
    in_dim = w1.shape[0]
    out_dim = w3.shape[1]
    assert out_dim <= 128, "packed b3 row holds at most 128 outputs"

    in_p = ((in_dim + 15) // 16) * 16   # bf16 sublane-pair aligned split point

    w1p = jnp.zeros((in_p, H1P), jnp.float32).at[:in_dim, :H1].set(w1)
    w2p = jnp.zeros((H1P, H2P), jnp.float32).at[:H1, :H2].set(w2)
    wpack = jnp.concatenate([w1p, w2p], axis=0).astype(jnp.bfloat16)

    vec = jnp.zeros((8, 128), jnp.float32)
    vec = vec.at[ROW_B1, :H1].set(b1.reshape(-1))
    vec = vec.at[ROW_B2, :H2].set(b2.reshape(-1))
    vec = vec.at[ROW_GAMMA, :H2].set(gamma.reshape(-1))   # padded gamma stays 0
    vec = vec.at[ROW_BETA, :H2].set(beta.reshape(-1))
    vec = vec.at[ROW_B3, :out_dim].set(b3.reshape(-1))

    if out_dim == 1:
        # f32 fc3 weight row for the VPU path; padded lanes zero so sigmoid(0)=0.5
        # there contributes nothing.
        vec = vec.at[ROW_W3, :H2].set(w3[:, 0])
        w3p = None
    else:
        w3p = jnp.zeros((H2P, out_dim), jnp.float32).at[:H2, :].set(w3).astype(jnp.bfloat16)

    return (wpack, w3p, vec, in_p, out_dim)


def mlp_forward(x, packed):
    """x: (B, ...) — flattened to (B, in_dim) like the PyTorch module."""
    wpack, w3p, vec, in_p, out_dim = packed
    B = x.shape[0]
    x2d = x.reshape(B, -1)
    in_dim = x2d.shape[1]
    if in_dim < in_p:                       # no-op when in_dim is already 16-aligned
        x2d = jnp.pad(x2d, ((0, 0), (0, in_p - in_dim)))
    x2d = x2d.astype(jnp.bfloat16)

    vmem = pl.BlockSpec(memory_space=pltpu.MemorySpace.VMEM)
    cparams = pltpu.CompilerParams(vmem_limit_bytes=32 * 1024 * 1024)

    if out_dim == 1:
        return pl.pallas_call(
            mlp_kernel_vec_out,
            out_shape=jax.ShapeDtypeStruct((B, 1), jnp.float32),
            in_specs=[vmem] * 3,
            out_specs=vmem,
            compiler_params=cparams,
        )(x2d, wpack, vec)
    return pl.pallas_call(
        mlp_kernel_mxu_out,
        out_shape=jax.ShapeDtypeStruct((B, out_dim), jnp.float32),
        in_specs=[vmem] * 4,
        out_specs=vmem,
        compiler_params=cparams,
    )(x2d, wpack, w3p, vec)


def reference_forward_f32(x, params):
    """Pure f32 reference with PyTorch semantics (two-pass batch variance)."""
    (w1, b1, w2, b2, gamma, beta, w3, b3) = params
    B = x.shape[0]
    x2d = x.reshape(B, -1).astype(jnp.float32)
    h1 = jnp.maximum(x2d @ w1 + b1, 0.0)
    z = h1 @ w2 + b2
    mean = jnp.mean(z, axis=0, keepdims=True)
    var = jnp.mean((z - mean) ** 2, axis=0, keepdims=True)
    zn = (z - mean) / jnp.sqrt(var + BN_EPS) * gamma + beta
    s = jax.nn.sigmoid(zn)
    return s @ w3 + b3


def reference_forward_mimic(x, params):
    """Mimics the kernel's numerics (bf16 MXU operands, f32 accum, 1-pass BN)."""
    (w1, b1, w2, b2, gamma, beta, w3, b3) = params
    B = x.shape[0]
    x2d = x.reshape(B, -1).astype(jnp.bfloat16)
    h1 = jnp.dot(x2d, w1.astype(jnp.bfloat16),
                 preferred_element_type=jnp.float32) + b1
    h1 = jnp.maximum(h1, 0.0)
    z = jnp.dot(h1.astype(jnp.bfloat16), w2.astype(jnp.bfloat16),
                preferred_element_type=jnp.float32) + b2
    inv_b = 1.0 / B
    mean = jnp.sum(z, axis=0, keepdims=True) * inv_b
    var = jnp.maximum(jnp.sum(z * z, axis=0, keepdims=True) * inv_b - mean * mean, 0.0)
    zn = (z - mean) * jax.lax.rsqrt(var + BN_EPS) * gamma + beta
    s = jax.nn.sigmoid(zn)
    return s @ w3 + b3


if __name__ == "__main__":
    key = jax.random.PRNGKey(0)
    k_x, k_p = jax.random.split(key)

    B, C, L = 8, 4, 8          # input (8, 4, 8) -> flattened in_dim = 32
    in_dim = C * L
    out_dim = 1

    x = jax.random.normal(k_x, (B, C, L), jnp.float32)
    params = init_params(k_p, in_dim, out_dim)
    packed = pack_params(params)

    out = mlp_forward(x, packed)
    out = jax.block_until_ready(out)
    assert out.shape == (B, out_dim)

    # tight check against a reference that mimics the kernel's numerics
    ref_mimic = reference_forward_mimic(x, params)
    assert jnp.allclose(out, ref_mimic, atol=1e-3, rtol=1e-3), "mismatch vs bf16 mimic reference"

    # loose check against the pure-f32 PyTorch-semantics reference (bf16 MXU rounding)
    ref_f32 = reference_forward_f32(x, params)
    assert jnp.allclose(out, ref_f32, atol=5e-2, rtol=5e-2), "mismatch vs f32 reference"

    print("KERNEL_OK")
</pallas_src>

<mosaic_0001>
module attributes {stable_mosaic.version = 11 : i64} {
  func.func @mlp_kernel_vec_out(%arg0: memref<8x32xbf16, #tpu.memory_space<vmem>>, %arg1: memref<160x128xbf16, #tpu.memory_space<vmem>>, %arg2: memref<8x128xf32, #tpu.memory_space<vmem>>, %arg3: memref<8x1xf32, #tpu.memory_space<vmem>>) attributes {dimension_semantics = [], scalar_prefetch = 0 : i64, scratch_operands = 0 : i64, tpu.core_type = #tpu.core_type<tc>} {
    %c0 = arith.constant 0 : index
    %c0_0 = arith.constant 0 : index
    %0 = vector.load %arg2[%c0, %c0_0] : memref<8x128xf32, #tpu.memory_space<vmem>>, vector<8x128xf32>
    %c0_1 = arith.constant 0 : index
    %c0_2 = arith.constant 0 : index
    %1 = vector.load %arg0[%c0_1, %c0_2] : memref<8x32xbf16, #tpu.memory_space<vmem>>, vector<8x32xbf16>
    %2 = vector.extract_strided_slice %0 {offsets = [0, 0], sizes = [1, 128], strides = [1, 1]} : vector<8x128xf32> to vector<1x128xf32>
    %3 = vector.extract_strided_slice %0 {offsets = [1, 0], sizes = [1, 128], strides = [1, 1]} : vector<8x128xf32> to vector<1x128xf32>
    %4 = vector.extract_strided_slice %0 {offsets = [2, 0], sizes = [1, 128], strides = [1, 1]} : vector<8x128xf32> to vector<1x128xf32>
    %5 = vector.extract_strided_slice %0 {offsets = [3, 0], sizes = [1, 128], strides = [1, 1]} : vector<8x128xf32> to vector<1x128xf32>
    %c0_3 = arith.constant 0 : index
    %c0_4 = arith.constant 0 : index
    %6 = vector.load %arg1[%c0_3, %c0_4] : memref<160x128xbf16, #tpu.memory_space<vmem>>, vector<32x128xbf16>
    %c32 = arith.constant 32 : index
    %c0_5 = arith.constant 0 : index
    %7 = vector.load %arg1[%c32, %c0_5] : memref<160x128xbf16, #tpu.memory_space<vmem>>, vector<128x128xbf16>
    %cst = arith.constant dense<0.000000e+00> : vector<8x128xf32>
    %8 = tpu.matmul %1, %6, %cst {dimension_numbers = #tpu.dot_dimension_numbers<[1], [0], [0], [1], [0, 0, 1, 1], [], []>} : vector<8x32xbf16>, vector<32x128xbf16>, vector<8x128xf32> -> vector<8x128xf32>
    %9 = vector.broadcast %2 : vector<1x128xf32> to vector<8x128xf32>
    %10 = arith.addf %8, %9 : vector<8x128xf32>
    %cst_6 = arith.constant 0.000000e+00 : f32
    %11 = vector.broadcast %cst_6 : f32 to vector<8x128xf32>
    %12 = arith.maximumf %10, %11 : vector<8x128xf32>
    %13 = arith.truncf %12 : vector<8x128xf32> to vector<8x128xbf16>
    %cst_7 = arith.constant dense<0.000000e+00> : vector<8x128xf32>
    %14 = tpu.matmul %13, %7, %cst_7 {dimension_numbers = #tpu.dot_dimension_numbers<[1], [0], [0], [1], [0, 0, 1, 1], [], []>} : vector<8x128xbf16>, vector<128x128xbf16>, vector<8x128xf32> -> vector<8x128xf32>
    %15 = vector.broadcast %3 : vector<1x128xf32> to vector<8x128xf32>
    %16 = arith.addf %14, %15 : vector<8x128xf32>
    %cst_8 = arith.constant dense<0.000000e+00> : vector<128xf32>
    %17 = vector.multi_reduction <add>, %16, %cst_8 [0] : vector<8x128xf32> to vector<128xf32>
    %18 = vector.shape_cast %17 : vector<128xf32> to vector<1x128xf32>
    %19 = arith.mulf %16, %16 : vector<8x128xf32>
    %cst_9 = arith.constant dense<0.000000e+00> : vector<128xf32>
    %20 = vector.multi_reduction <add>, %19, %cst_9 [0] : vector<8x128xf32> to vector<128xf32>
    %21 = vector.shape_cast %20 : vector<128xf32> to vector<1x128xf32>
    %cst_10 = arith.constant 1.250000e-01 : f32
    %22 = vector.broadcast %cst_10 : f32 to vector<1x128xf32>
    %23 = arith.mulf %18, %22 : vector<1x128xf32>
    %cst_11 = arith.constant 1.250000e-01 : f32
    %24 = vector.broadcast %cst_11 : f32 to vector<1x128xf32>
    %25 = arith.mulf %21, %24 : vector<1x128xf32>
    %26 = arith.mulf %23, %23 : vector<1x128xf32>
    %27 = arith.subf %25, %26 : vector<1x128xf32>
    %cst_12 = arith.constant 0.000000e+00 : f32
    %28 = vector.broadcast %cst_12 : f32 to vector<1x128xf32>
    %29 = arith.maximumf %27, %28 : vector<1x128xf32>
    %30 = vector.broadcast %23 : vector<1x128xf32> to vector<8x128xf32>
    %31 = arith.subf %16, %30 : vector<8x128xf32>
    %cst_13 = arith.constant 9.99999974E-6 : f32
    %32 = vector.broadcast %cst_13 : f32 to vector<1x128xf32>
    %33 = arith.addf %29, %32 : vector<1x128xf32>
    %34 = math.rsqrt %33 : vector<1x128xf32>
    %35 = vector.broadcast %34 : vector<1x128xf32> to vector<8x128xf32>
    %36 = arith.mulf %31, %35 : vector<8x128xf32>
    %37 = vector.broadcast %4 : vector<1x128xf32> to vector<8x128xf32>
    %38 = arith.mulf %36, %37 : vector<8x128xf32>
    %39 = vector.broadcast %5 : vector<1x128xf32> to vector<8x128xf32>
    %40 = arith.addf %38, %39 : vector<8x128xf32>
    %41 = arith.negf %40 : vector<8x128xf32>
    %42 = math.exp %41 : vector<8x128xf32>
    %cst_14 = arith.constant 1.000000e+00 : f32
    %43 = vector.broadcast %cst_14 : f32 to vector<8x128xf32>
    %44 = arith.addf %43, %42 : vector<8x128xf32>
    %45 = arith.divf %43, %44 : vector<8x128xf32>
    %46 = vector.extract_strided_slice %0 {offsets = [5, 0], sizes = [1, 128], strides = [1, 1]} : vector<8x128xf32> to vector<1x128xf32>
    %47 = vector.extract_strided_slice %0 {offsets = [4, 0], sizes = [1, 1], strides = [1, 1]} : vector<8x128xf32> to vector<1x1xf32>
    %48 = vector.broadcast %46 : vector<1x128xf32> to vector<8x128xf32>
    %49 = arith.mulf %45, %48 : vector<8x128xf32>
    %cst_15 = arith.constant dense<0.000000e+00> : vector<8xf32>
    %50 = vector.multi_reduction <add>, %49, %cst_15 [1] : vector<8x128xf32> to vector<8xf32>
    %51 = vector.shape_cast %50 : vector<8xf32> to vector<8x1xf32>
    %52 = vector.broadcast %47 : vector<1x1xf32> to vector<8x1xf32>
    %53 = arith.addf %51, %52 : vector<8x1xf32>
    %c0_16 = arith.constant 0 : index
    %c0_17 = arith.constant 0 : index
    %54 = vector.load %arg3[%c0_16, %c0_17] : memref<8x1xf32, #tpu.memory_space<vmem>>, vector<8x1xf32>
    tpu.vector_store %arg3[%c0_16, %c0_17], %53 {strides = array<i32>} : memref<8x1xf32, #tpu.memory_space<vmem>>, vector<8x1xf32>,
    return
  }
}

</mosaic_0001>

<llo_original>
// kernel: tpu_custom_call.1
$region0: #{tpu_custom_call.1}
  #allocation0 [shape = 'u32[]', space=smem, size = 0x4, offset = 0x4, fixed_abs, tag = 'smem constant byte address 0x4 - core index']
  #allocation1 [shape = 'u32[144,128]{1,0:T(1,128)}', space=vmem, size = 0x12000, scoped, tag = 'internal scratch']
  %s0 = inlined_call_operand.hbm [shape: bf16[8,32], index: 0, kind: input, shape index: {}]
  %s1 = inlined_call_operand.hbm [shape: bf16[160,128], index: 1, kind: input, shape index: {}]
  %s2 = inlined_call_operand.hbm [shape: f32[8,128], index: 2, kind: input, shape index: {}]
  %s3 = inlined_call_operand.vmem [shape: f32[8,1], index: 3, kind: output, shape index: {}]
  %s4 = sld [smem:[#allocation0]]
  $region34: #{tpu_custom_call.1} parent=0
    _
  %s6 = ssub.s32 1, %s4
  %s7 = scalar_select 0, %s6, %s4
  $region1: #{tpu_custom_call.1} parent=0
    #allocation2 [shape = 'u8[2048]{0}', space=vmem, size = 0x800, scoped, tag = 'input window, operand 0, single buffered']
    #allocation3 [shape = 's32[1]{0}', space=sflag, size = 0x4, scoped, tag = 'scoped memory for tpu_custom_call.1']
    #allocation4 [shape = 'u8[40960]{0}', space=vmem, size = 0xa000, scoped, tag = 'input window, operand 1, single buffered']
    #allocation5 [shape = 's32[1]{0}', space=sflag, size = 0x4, scoped, tag = 'scoped memory for tpu_custom_call.1']
    #allocation6 [shape = 'u8[4096]{0}', space=vmem, size = 0x1000, scoped, tag = 'input window, operand 2, single buffered']
    %8 = vsyncpa [#allocation3], 0
    %9 = vsyncpa [#allocation5], 0
    // Predicated region
    $region2: #{tpu_custom_call.1} parent=1 // pred_check
      _
    $region3: #{tpu_custom_call.1} parent=1 // pred_check_branch
      %11 = sbr.rel (0) target = $region5
    $region4: #{tpu_custom_call.1} parent=1 // pred_region
      %s13 = ssub.s32 64, 64
      %14 = vsyncadd [#allocation3], %s13
      %s16 = sshll.u32 [#allocation2], 4
      %s17 = int_to_ptr.vmem [resolvable:$true] %s16
      %19 = dma.hbm_to_vmem [thread:$0]  %s0, 64, %s17, [#allocation3]
    $region5: #{tpu_custom_call.1} parent=1 // pred_fallthru
      _
    // Predicated region
    $region6: #{tpu_custom_call.1} parent=1 // pred_check
      _
    $region7: #{tpu_custom_call.1} parent=1 // pred_check_branch
      %21 = sbr.rel (0) target = $region9
    $region8: #{tpu_custom_call.1} parent=1 // pred_region
      %s23 = ssub.s32 1280, 1280
      %24 = vsyncadd [#allocation5], %s23
      %s25 = sshll.u32 [#allocation4], 4
      %s26 = int_to_ptr.vmem [resolvable:$true] %s25
      %31 = dma.hbm_to_vmem [thread:$0]  %s1, 1280, %s26, [#allocation5], 64, 64, 4
    $region9: #{tpu_custom_call.1} parent=1 // pred_fallthru
      _
    // Predicated region
    $region10: #{tpu_custom_call.1} parent=1 // pred_check
      _
    $region11: #{tpu_custom_call.1} parent=1 // pred_check_branch
      %33 = sbr.rel (0) target = $region13
    $region12: #{tpu_custom_call.1} parent=1 // pred_region
      %s35 = ssub.s32 128, 128
      %36 = vsyncadd [#allocation5], %s35
      %s38 = sshll.u32 [#allocation6], 4
      %s39 = int_to_ptr.vmem [resolvable:$true] %s38
      %41 = dma.hbm_to_vmem [thread:$0]  %s2, 128, %s39, [#allocation5]
    $region13: #{tpu_custom_call.1} parent=1 // pred_fallthru
      _
    // Predicated region
    $region14: #{tpu_custom_call.1} parent=1 // pred_check
      _
    $region15: #{tpu_custom_call.1} parent=1 // pred_check_branch
      %43 = sbr.rel (0) target = $region17
    $region16: #{tpu_custom_call.1} parent=1 // pred_region
      %44 = dma.done [#allocation3], 64
    $region17: #{tpu_custom_call.1} parent=1 // pred_fallthru
      _
    // Predicated region
    $region18: #{tpu_custom_call.1} parent=1 // pred_check
      _
    $region19: #{tpu_custom_call.1} parent=1 // pred_check_branch
      %46 = sbr.rel (0) target = $region21
    $region20: #{tpu_custom_call.1} parent=1 // pred_region
      %47 = dma.done [#allocation5], 1280
    $region21: #{tpu_custom_call.1} parent=1 // pred_fallthru
      _
    // Predicated region
    $region22: #{tpu_custom_call.1} parent=1 // pred_check
      _
    $region23: #{tpu_custom_call.1} parent=1 // pred_check_branch
      %49 = sbr.rel (0) target = $region25
    $region24: #{tpu_custom_call.1} parent=1 // pred_region
      %50 = dma.done [#allocation5], 128
    $region25: #{tpu_custom_call.1} parent=1 // pred_fallthru
      _
    %v52 = vld [vmem:[#allocation6] sm:$0xff]
    %v53 = vld [vmem:[#allocation2] sm:$0xf]
    %v54 = vld [vmem:[#allocation4] sm:$0xf]
    %v55 = vld [vmem:[#allocation4 + $0x4] sm:$0xf]
    %v56 = vld [vmem:[#allocation4 + $0x8] sm:$0xf]
    %v57 = vld [vmem:[#allocation4 + $0xc] sm:$0xf]
    %v58 = vld [vmem:[#allocation4 + $0x10] sm:$0xf]
    %v59 = vld [vmem:[#allocation4 + $0x14] sm:$0xf]
    %v60 = vld [vmem:[#allocation4 + $0x18] sm:$0xf]
    %v61 = vld [vmem:[#allocation4 + $0x1c] sm:$0xf]
    %v62 = vld [vmem:[#allocation4 + $0x20] sm:$0xf]
    %v63 = vld [vmem:[#allocation4 + $0x24] sm:$0xf]
    %v64 = vld [vmem:[#allocation4 + $0x28] sm:$0xf]
    %v65 = vld [vmem:[#allocation4 + $0x2c] sm:$0xf]
    %v66 = vld [vmem:[#allocation4 + $0x30] sm:$0xf]
    %v67 = vld [vmem:[#allocation4 + $0x34] sm:$0xf]
    %v68 = vld [vmem:[#allocation4 + $0x38] sm:$0xf]
    %v69 = vld [vmem:[#allocation4 + $0x3c] sm:$0xf]
    %v70 = vld [vmem:[#allocation4 + $0x40] sm:$0xf]
    %v71 = vld [vmem:[#allocation4 + $0x44] sm:$0xf]
    %v72 = vld [vmem:[#allocation4 + $0x48] sm:$0xf]
    %v73 = vld [vmem:[#allocation4 + $0x4c] sm:$0xf]
    %v74 = vlaneseq
    %v75 = vshrl.u32 %v74, 7
    %v76 = vsub.s32 0, %v75
    %v77 = vrot.slane %v52, %v76
    %v82 = vunpack.c.l.b16 %v54
    %v83 = vunpack.c.l.b16 %v55
    %v84 = vunpack.c.l.b16 %v56
    %v85 = vunpack.c.l.b16 %v57
    %v86 = vpack.c.b16 %v83, %v82
    %v87 = vpack.c.b16 %v85, %v84
    %vm90 = vcmask 261120
    %v92 = vsel %vm90, %v53, 0
    %94 = vmatprep.subr.bf16.mxu0 0
    %95 = vmatpush1.bf16.msra.mxu0 %v86
    %96 = vmatprep.subr.bf16.mxu0 0
    %97 = vmatpush1.bf16.msra.mxu0 %v87
    %98 = vmatprep.subr.bf16.mxu0 0
    %99 = vmatpush1.bf16.msra.mxu0 0
    %100 = vmatprep.subr.bf16.mxu0 0
    %101 = vmatpush1.bf16.msra.mxu0 0
    %102 = vmatprep.subr.bf16.mxu0 0
    %103 = vmatpush1.bf16.msra.mxu0 0
    %104 = vmatprep.subr.bf16.mxu0 0
    %105 = vmatpush1.bf16.msra.mxu0 0
    %106 = vmatprep.subr.bf16.mxu0 0
    %107 = vmatpush1.bf16.msra.mxu0 0
    %108 = vmatprep.subr.bf16.mxu0 0
    %109 = vmatpush1.bf16.msra.mxu0 0
    %110 = vmatprep.subr.bf16.mxu0 0
    %111 = vmatpush1.bf16.msra.mxu0 0
    %112 = vmatprep.subr.bf16.mxu0 0
    %113 = vmatpush1.bf16.msra.mxu0 0
    %114 = vmatprep.subr.bf16.mxu0 0
    %115 = vmatpush1.bf16.msra.mxu0 0
    %116 = vmatprep.subr.bf16.mxu0 0
    %117 = vmatpush1.bf16.msra.mxu0 0
    %118 = vmatprep.subr.bf16.mxu0 0
    %119 = vmatpush1.bf16.msra.mxu0 0
    %120 = vmatprep.subr.bf16.mxu0 0
    %121 = vmatpush1.bf16.msra.mxu0 0
    %122 = vmatprep.subr.bf16.mxu0 0
    %123 = vmatpush1.bf16.msra.mxu0 0
    %124 = vmatprep.subr.bf16.mxu0 0
    %125 = vmatpush1.bf16.msra.mxu0 0
    %126 = vmatprep.mubr.bf16.mxu0 0
    %127 = vmatmul.mubr.bf16.gmra.mrb[0].mxu0 %v92
    %v128 = vpop.f32.mrb[0].mxu0
    %v129 = vadd.f32 %v77, %v128
    %v130 = vpop.f32.mrb[0].mxu0
    %v131 = vpop.f32.mrb[0].mxu0
    %v132 = vpop.f32.mrb[0].mxu0
    %133 = vdwg.mxu0
    %v134 = vmax.f32 %v129, 0.0
    %v135 = vpack.c.bf16 %v134, %v134
    %v136 = vlaneseq
    %v137 = vshrl.u32 %v136, 7
    %v138 = vsub.s32 1, %v137
    %v139 = vrot.slane %v52, %v138
    %v156 = vunpack.c.l.b16 %v58
    %v157 = vunpack.c.l.b16 %v59
    %v158 = vunpack.c.l.b16 %v60
    %v159 = vunpack.c.l.b16 %v61
    %v160 = vunpack.c.l.b16 %v62
    %v161 = vunpack.c.l.b16 %v63
    %v162 = vunpack.c.l.b16 %v64
    %v163 = vunpack.c.l.b16 %v65
    %v164 = vunpack.c.l.b16 %v66
    %v165 = vunpack.c.l.b16 %v67
    %v166 = vunpack.c.l.b16 %v68
    %v167 = vunpack.c.l.b16 %v69
    %v168 = vunpack.c.l.b16 %v70
    %v169 = vunpack.c.l.b16 %v71
    %v170 = vunpack.c.l.b16 %v72
    %v171 = vunpack.c.l.b16 %v73
    %v172 = vpack.c.b16 %v157, %v156
    %v173 = vpack.c.b16 %v159, %v158
    %v174 = vpack.c.b16 %v161, %v160
    %v175 = vpack.c.b16 %v163, %v162
    %v176 = vpack.c.b16 %v165, %v164
    %v177 = vpack.c.b16 %v167, %v166
    %v178 = vpack.c.b16 %v169, %v168
    %v179 = vpack.c.b16 %v171, %v170
    %188 = vmatprep.subr.bf16.mxu0 0
    %189 = vmatpush1.bf16.msra.mxu0 %v172
    %190 = vmatprep.subr.bf16.mxu0 0
    %191 = vmatpush1.bf16.msra.mxu0 %v173
    %192 = vmatprep.subr.bf16.mxu0 0
    %193 = vmatpush1.bf16.msra.mxu0 %v174
    %194 = vmatprep.subr.bf16.mxu0 0
    %195 = vmatpush1.bf16.msra.mxu0 %v175
    %196 = vmatprep.subr.bf16.mxu0 0
    %197 = vmatpush1.bf16.msra.mxu0 %v176
    %198 = vmatprep.subr.bf16.mxu0 0
    %199 = vmatpush1.bf16.msra.mxu0 %v177
    %200 = vmatprep.subr.bf16.mxu0 0
    %201 = vmatpush1.bf16.msra.mxu0 %v178
    %202 = vmatprep.subr.bf16.mxu0 0
    %203 = vmatpush1.bf16.msra.mxu0 %v179
    %204 = vmatprep.subr.bf16.mxu0 0
    %205 = vmatpush1.bf16.msra.mxu0 0
    %206 = vmatprep.subr.bf16.mxu0 0
    %207 = vmatpush1.bf16.msra.mxu0 0
    %208 = vmatprep.subr.bf16.mxu0 0
    %209 = vmatpush1.bf16.msra.mxu0 0
    %210 = vmatprep.subr.bf16.mxu0 0
    %211 = vmatpush1.bf16.msra.mxu0 0
    %212 = vmatprep.subr.bf16.mxu0 0
    %213 = vmatpush1.bf16.msra.mxu0 0
    %214 = vmatprep.subr.bf16.mxu0 0
    %215 = vmatpush1.bf16.msra.mxu0 0
    %216 = vmatprep.subr.bf16.mxu0 0
    %217 = vmatpush1.bf16.msra.mxu0 0
    %218 = vmatprep.subr.bf16.mxu0 0
    %219 = vmatpush1.bf16.msra.mxu0 0
    %220 = vmatprep.mubr.bf16.mxu0 0
    %221 = vmatmul.mubr.bf16.gmra.mrb[0].mxu0 %v135
    %v222 = vpop.f32.mrb[0].mxu0
    %v223 = vadd.f32 %v139, %v222
    %v224 = vpop.f32.mrb[0].mxu0
    %v225 = vpop.f32.mrb[0].mxu0
    %v226 = vpop.f32.mrb[0].mxu0
    %227 = vdwg.mxu0
    %v228 = vrot.slane %v223, 4
    %v229 = vadd.f32 %v223, %v228
    %v230 = vrot.slane %v229, 2
    %v231 = vadd.f32 %v229, %v230
    %v232 = vrot.slane %v231, 1
    %v233 = vadd.f32 %v231, %v232
    %v234 = vmul.f32 %v223, %v223
    %v235 = vrot.slane %v234, 4
    %v236 = vadd.f32 %v234, %v235
    %v237 = vrot.slane %v236, 2
    %v238 = vadd.f32 %v236, %v237
    %v239 = vrot.slane %v238, 1
    %v240 = vadd.f32 %v238, %v239
    %v241 = vmul.f32 %v233, 0.125
    %v242 = vmul.f32 %v240, 0.125
    %v243 = vmul.f32 %v241, %v241
    %v244 = vsub.f32 %v242, %v243
    %v245 = vmax.f32 %v244, 0.0
    %v246 = vsub.f32 %v223, %v241
    %v247 = vadd.f32 %v245, 1e-05
    %v248 = vrsqrt.pop %v247
    %v249 = vmul.f32 %v246, %v248
    %v250 = vlaneseq
    %v251 = vshrl.u32 %v250, 7
    %v252 = vsub.s32 2, %v251
    %v253 = vrot.slane %v52, %v252
    %v254 = vmul.f32 %v249, %v253
    %v255 = vlaneseq
    %v256 = vshrl.u32 %v255, 7
    %v257 = vsub.s32 3, %v256
    %v258 = vrot.slane %v52, %v257
    %v259 = vadd.f32 %v254, %v258
    %v260 = vxor.u32 %v259, 2147483648
    %v261 = vmul.f32 %v260, 1.442695
    %v262 = vpow.pop %v261
    %v263 = vadd.f32 %v262, 1.0
    %v264 = vrcp.pop %v263
    %v265 = vmul.f32 1.0, %v264
    %v266 = vlaneseq
    %v267 = vshrl.u32 %v266, 7
    %v268 = vsub.s32 5, %v267
    %v269 = vrot.slane %v52, %v268
    %v270 = vmul.f32 %v265, %v269
    %271 = vadd.xlane.f32.xlu0 %v270
    %v272 = vpop.xlane.xlu0 %271
    %v273 = vlaneseq
    %v274 = vshrl.u32 %v273, 7
    %v275 = vsub.s32 4, %v274
    %v276 = vrot.slane %v52, %v275
    %v277 = vadd.f32 %v272, %v276
    %vm278 = vcmask 7168
    %279 = vst.msk [vmem:[%s3] sm:$0xff] %vm278, %v277
    // Predicated region
    $region26: #{tpu_custom_call.1} parent=1 // pred_check
      _
    $region27: #{tpu_custom_call.1} parent=1 // pred_check_branch
      %281 = sbr.rel (0) target = $region29
    $region28: #{tpu_custom_call.1} parent=1 // pred_region
      _
    $region29: #{tpu_custom_call.1} parent=1 // pred_fallthru
      _
    // Predicated region
    $region30: #{tpu_custom_call.1} parent=1 // pred_check
      _
    $region31: #{tpu_custom_call.1} parent=1 // pred_check_branch
      %283 = sbr.rel (0) target = $region33
    $region32: #{tpu_custom_call.1} parent=1 // pred_region
      _
    $region33: #{tpu_custom_call.1} parent=1 // pred_fallthru
      _
    %284 = vsyncpa [#allocation3], 1
    %285 = vsyncpa [#allocation5], 1

</llo_original>
